<compile_context>
chip_gen: v7x
topology: tpu7x:2x2x1
jax: 0.10.0
libtpu: 0.0.40
codegen_flags: <defaults>
</compile_context>

<pallas_src>
import jax
import jax.numpy as jnp
import numpy as np
from jax import lax
from jax.experimental import pallas as pl
from jax.experimental.pallas import tpu as pltpu


# ----------------------------------------------------------------------------
# Kernel
# ----------------------------------------------------------------------------
def _conv_band_kernel(x_ref, band_ref, bias_ref, o_ref):
    """3x3 SAME conv as KH block-Toeplitz matmuls.

    x_ref:    (N, Hp, W*Cin)      H-padded NHWC input, W and C flattened (resident)
    band_ref: (KH, W*Cin, W*Cout) block-Toeplitz bands (W zero-pad folded in)
    bias_ref: (1, W*Cout)         f32 bias tiled across W (lane-dense)
    o_ref:    (N, TH, W*Cout)     output rows [i*TH, (i+1)*TH), lane-dense
    """
    N, TH, WC = o_ref.shape
    KH, K, _ = band_ref.shape

    # First padded input row needed by this tile.  TH is either the full H
    # (GH=1) or a multiple of 8 (GH=2 guard), so the start is sublane-aligned.
    h0 = pl.multiple_of(pl.program_id(0) * TH, 8)

    # One aligned super-window load; the kh windows are register slices of it.
    win = x_ref[:, pl.ds(h0, TH + KH - 1), :]                 # (N, TH+KH-1, K)

    # Accumulator starts from the broadcast bias -> single store epilogue.
    acc = jnp.broadcast_to(bias_ref[...], (N * TH, WC)).astype(jnp.float32)
    for kh in range(KH):                                      # static, KH = 3
        rows2d = win[:, kh:kh + TH, :].reshape(N * TH, K)     # leading-dim merge
        acc = acc + jnp.dot(rows2d.astype(band_ref.dtype), band_ref[kh],
                            preferred_element_type=jnp.float32)
    o_ref[...] = acc.reshape(N, TH, WC).astype(o_ref.dtype)


# ----------------------------------------------------------------------------
# One-time parameter prep (per parameter update, NOT per forward call)
# ----------------------------------------------------------------------------
def build_prob_conv_params(weight_oihw, bias, W, operand_dtype=jnp.float32):
    """Block-Toeplitz band + lane-dense bias row for the conv kernel.

    band[kh, wi*Cin + c, w*Cout + o] = weight[o, c, kh, wi - w + pad]
    when 0 <= wi - w + pad < KW, else 0.  This folds the W zero-padding into
    the weights, so the activation only needs H padding.
    Built with a single vectorized gather (no W sequential scatters).
    """
    Cout, Cin, KH, KW = weight_oihw.shape
    assert KH == KW and KH % 2 == 1, (
        "band construction assumes odd square kernel, stride 1, dilation 1")
    pad = KH // 2

    r = jnp.arange(W * Cin)
    q = jnp.arange(W * Cout)
    wi, c = r // Cin, r % Cin                 # input column / input channel
    w, o = q // Cout, q % Cout                # output column / output channel
    kw = wi[:, None] - w[None, :] + pad                        # (W*Cin, W*Cout)
    valid = (kw >= 0) & (kw < KW)
    kw_c = jnp.clip(kw, 0, KW - 1)

    wt = jnp.transpose(weight_oihw, (2, 0, 1, 3))              # (KH, Cout, Cin, KW)
    band = wt[:, o[None, :], c[:, None], kw_c]                 # (KH, W*Cin, W*Cout)
    band = jnp.where(valid[None, :, :], band, 0.0).astype(operand_dtype)

    # Bias stays f32: it seeds the f32 accumulator inside the kernel.
    bias_row = jnp.tile(bias.astype(jnp.float32), (W,)).reshape(1, W * Cout)
    return band, bias_row


# ----------------------------------------------------------------------------
# Grid selection (device / size aware)
# ----------------------------------------------------------------------------
def _tensorcores_per_chip():
    try:
        kind = jax.devices()[0].device_kind.lower()
    except Exception:                                          # pragma: no cover
        return 1
    # v5e / v5-lite / v6e expose a single TensorCore per chip: grid = serial loop.
    if any(tag in kind for tag in ("v5", "v6", "lite")):
        return 1
    return 2


def _pick_grid(N, H):
    # One grid step unless (a) the chip has >1 TensorCore and (b) the per-core
    # matmul M = N*H/2 is big enough (>=128 rows) to amortize the ~0.35 us
    # per-grid-step overhead and keep the MXU fed.  At the shapes here -> 1.
    if (_tensorcores_per_chip() >= 2 and H % 2 == 0 and (H // 2) % 8 == 0
            and (N * H) // 2 >= 128):
        return 2
    return 1


def _resident_spec(block_shape, index_map):
    """BlockSpec for a block whose index_map is constant across the grid:
    single-buffer it (double-buffering a never-changing block only costs VMEM)."""
    try:
        return pl.BlockSpec(block_shape, index_map, pipeline_mode=pl.Buffered(1))
    except (TypeError, AttributeError):   # older jax without pipeline_mode
        return pl.BlockSpec(block_shape, index_map)


# ----------------------------------------------------------------------------
# Forward
# ----------------------------------------------------------------------------
def prob_conv_forward(x_nchw, band, bias_row, logsigma):
    """ProbConv.forward.  x_nchw: (N, Cin, H, W).  Returns (mu_nchw, logsigma)."""
    N, Cin, H, W = x_nchw.shape
    KH, WCin, WCout = band.shape
    assert WCin == W * Cin, "band was built for a different W / Cin"
    Cout = WCout // W
    pad = KH // 2

    # TODO(synk): in a full pipeline keep activations in the flattened
    # (N, H, W*C) NHWC layout across layers and fold the H zero-padding into
    # the kernel (masked boundary windows) to drop these wrapper ops entirely.
    x_flat = jnp.transpose(x_nchw, (0, 2, 3, 1)).reshape(N, H, W * Cin)
    x_padH = jnp.pad(x_flat, ((0, 0), (pad, pad), (0, 0)))     # (N, Hp, W*Cin)
    Hp = H + 2 * pad

    GH = _pick_grid(N, H)
    TH = H // GH

    # TODO(synk): add W/Cout (lane) tiling before reusing this resident-band
    # design on larger feature maps -- band bytes grow as O(KH*W^2*Cin*Cout)
    # and must stay well under VMEM (64 MiB on v7x).
    itemsize = jnp.dtype(x_nchw.dtype).itemsize
    band_bytes = band.size * jnp.dtype(band.dtype).itemsize
    assert band_bytes < 32 * 1024 * 1024, "band too large for resident-VMEM design"

    # Scheduler hint only; NOTE flops counts the band's structural zeros.
    flops = 2 * KH * (N * H) * (W * Cin) * (W * Cout)
    bytes_accessed = int(x_padH.size * itemsize + band_bytes
                         + bias_row.size * 4 + N * H * W * Cout * itemsize)
    cost = pl.CostEstimate(flops=flops, transcendentals=0,
                           bytes_accessed=bytes_accessed)

    mu_flat = pl.pallas_call(
        _conv_band_kernel,
        out_shape=jax.ShapeDtypeStruct((N, H, W * Cout), x_nchw.dtype),
        grid_spec=pltpu.PrefetchScalarGridSpec(
            num_scalar_prefetch=0,
            grid=(GH,),
            in_specs=[
                # Constant block indices -> fetched once, resident, single-buffered.
                _resident_spec((N, Hp, W * Cin), lambda i: (0, 0, 0)),
                _resident_spec((KH, W * Cin, W * Cout), lambda i: (0, 0, 0)),
                _resident_spec((1, W * Cout), lambda i: (0, 0)),
            ],
            out_specs=pl.BlockSpec((N, TH, W * Cout), lambda i: (0, i, 0)),
        ),
        compiler_params=pltpu.CompilerParams(
            dimension_semantics=("parallel",)),
        cost_estimate=cost,
    )(x_padH, band, bias_row)

    # Back to the module's public NCHW layout (metadata reshape + one transpose).
    mu_nchw = jnp.transpose(mu_flat.reshape(N, H, W, Cout), (0, 3, 1, 2))
    return mu_nchw, logsigma


if __name__ == "__main__":
    # Small shapes consistent with the module: batch=2, Cin=4, Cout=8, 16x16.
    N, Cin, Cout, H, W, K = 2, 4, 8, 16, 16, 3
    per_channel = True
    num_sigmas = Cout if per_channel else 1

    key = jax.random.PRNGKey(0)
    kx, kw, kb, ks = jax.random.split(key, 4)
    x = jax.random.normal(kx, (N, Cin, H, W), dtype=jnp.float32)
    weight = jax.random.normal(kw, (Cout, Cin, K, K), dtype=jnp.float32) * 0.1
    bias = jax.random.normal(kb, (Cout,), dtype=jnp.float32) * 0.1
    logsigma = jax.random.normal(ks, (num_sigmas, 1, 1), dtype=jnp.float32)

    # Parameter-dependent prep runs ONCE (per parameter update), not per call.
    band, bias_row = build_prob_conv_params(weight, bias, W)

    fwd = jax.jit(prob_conv_forward)
    mu, ls = fwd(x, band, bias_row, logsigma)
    jax.block_until_ready((mu, ls))

    # Reference: XLA conv with the same semantics as torch Conv2d(pad=1) + bias.
    ref = lax.conv_general_dilated(
        x, weight, window_strides=(1, 1), padding="SAME",
        dimension_numbers=("NCHW", "OIHW", "NCHW")) + bias[None, :, None, None]
    np.testing.assert_allclose(np.asarray(mu), np.asarray(ref),
                               rtol=1e-4, atol=1e-4)
    assert ls.shape == (num_sigmas, 1, 1)
    np.testing.assert_allclose(np.asarray(ls), np.asarray(logsigma))

    # Optional bf16-operand path (f32 MXU accumulation): half the band DMA /
    # VMEM and ~3x MXU throughput; validated at a looser tolerance.
    band_bf16, bias_row_b = build_prob_conv_params(
        weight, bias, W, operand_dtype=jnp.bfloat16)
    mu_b, _ = fwd(x, band_bf16, bias_row_b, logsigma)
    jax.block_until_ready(mu_b)
    np.testing.assert_allclose(np.asarray(mu_b), np.asarray(ref),
                               rtol=3e-2, atol=3e-2)

    print("KERNEL_OK")
</pallas_src>

<mosaic_0001>
module attributes {stable_mosaic.version = 11 : i64} {
  func.func @_conv_band_kernel(%arg0: i32, %arg1: memref<2x18x64xf32, #tpu.memory_space<vmem>>, %arg2: memref<3x64x128xf32, #tpu.memory_space<vmem>>, %arg3: memref<1x128xf32, #tpu.memory_space<vmem>>, %arg4: memref<2x16x128xf32, #tpu.memory_space<vmem>>) attributes {dimension_semantics = [#tpu.dimension_semantics<parallel>], iteration_bounds = array<i64: 1>, scalar_prefetch = 0 : i64, scratch_operands = 0 : i64, tpu.core_type = #tpu.core_type<tc>, window_params = [{pipeline_mode = #tpu.pipeline_mode<synchronous>, transform_indices = @transform_0, window_bounds = array<i64: 2, 18, 64>}, {pipeline_mode = #tpu.pipeline_mode<synchronous>, transform_indices = @transform_1, window_bounds = array<i64: 3, 64, 128>}, {pipeline_mode = #tpu.pipeline_mode<synchronous>, transform_indices = @transform_2, window_bounds = array<i64: 1, 128>}, {transform_indices = @transform_3, window_bounds = array<i64: 2, 16, 128>}]} {
    %c16_i32 = arith.constant 16 : i32
    %0 = arith.muli %arg0, %c16_i32 : i32
    %1 = tpu.assume_multiple %0, 8 : i32
    %c0 = arith.constant 0 : index
    %2 = arith.index_cast %1 : i32 to index
    %c0_0 = arith.constant 0 : index
    %3 = vector.load %arg1[%c0, %2, %c0_0] : memref<2x18x64xf32, #tpu.memory_space<vmem>>, vector<2x18x64xf32>
    %c0_1 = arith.constant 0 : index
    %c0_2 = arith.constant 0 : index
    %4 = vector.load %arg3[%c0_1, %c0_2] : memref<1x128xf32, #tpu.memory_space<vmem>>, vector<1x128xf32>
    %5 = vector.shape_cast %4 : vector<1x128xf32> to vector<1x128xf32>
    %6 = vector.broadcast %5 : vector<1x128xf32> to vector<32x128xf32>
    %7 = vector.extract_strided_slice %3 {offsets = [0, 0, 0], sizes = [2, 16, 64], strides = [1, 1, 1]} : vector<2x18x64xf32> to vector<2x16x64xf32>
    %8 = vector.shape_cast %7 : vector<2x16x64xf32> to vector<32x64xf32>
    %c0_3 = arith.constant 0 : index
    %c0_4 = arith.constant 0 : index
    %c0_5 = arith.constant 0 : index
    %9 = vector.load %arg2[%c0_3, %c0_4, %c0_5] : memref<3x64x128xf32, #tpu.memory_space<vmem>>, vector<1x64x128xf32>
    %10 = vector.shape_cast %9 : vector<1x64x128xf32> to vector<64x128xf32>
    %cst = arith.constant dense<0.000000e+00> : vector<32x128xf32>
    %11 = tpu.matmul %8, %10, %cst {dimension_numbers = #tpu.dot_dimension_numbers<[1], [0], [0], [1], [0, 0, 1, 1], [], []>} : vector<32x64xf32>, vector<64x128xf32>, vector<32x128xf32> -> vector<32x128xf32>
    %12 = arith.addf %6, %11 : vector<32x128xf32>
    %13 = vector.extract_strided_slice %3 {offsets = [0, 1, 0], sizes = [2, 16, 64], strides = [1, 1, 1]} : vector<2x18x64xf32> to vector<2x16x64xf32>
    %14 = vector.shape_cast %13 : vector<2x16x64xf32> to vector<32x64xf32>
    %c1 = arith.constant 1 : index
    %c0_6 = arith.constant 0 : index
    %c0_7 = arith.constant 0 : index
    %15 = vector.load %arg2[%c1, %c0_6, %c0_7] : memref<3x64x128xf32, #tpu.memory_space<vmem>>, vector<1x64x128xf32>
    %16 = vector.shape_cast %15 : vector<1x64x128xf32> to vector<64x128xf32>
    %cst_8 = arith.constant dense<0.000000e+00> : vector<32x128xf32>
    %17 = tpu.matmul %14, %16, %cst_8 {dimension_numbers = #tpu.dot_dimension_numbers<[1], [0], [0], [1], [0, 0, 1, 1], [], []>} : vector<32x64xf32>, vector<64x128xf32>, vector<32x128xf32> -> vector<32x128xf32>
    %18 = arith.addf %12, %17 : vector<32x128xf32>
    %19 = vector.extract_strided_slice %3 {offsets = [0, 2, 0], sizes = [2, 16, 64], strides = [1, 1, 1]} : vector<2x18x64xf32> to vector<2x16x64xf32>
    %20 = vector.shape_cast %19 : vector<2x16x64xf32> to vector<32x64xf32>
    %c2 = arith.constant 2 : index
    %c0_9 = arith.constant 0 : index
    %c0_10 = arith.constant 0 : index
    %21 = vector.load %arg2[%c2, %c0_9, %c0_10] : memref<3x64x128xf32, #tpu.memory_space<vmem>>, vector<1x64x128xf32>
    %22 = vector.shape_cast %21 : vector<1x64x128xf32> to vector<64x128xf32>
    %cst_11 = arith.constant dense<0.000000e+00> : vector<32x128xf32>
    %23 = tpu.matmul %20, %22, %cst_11 {dimension_numbers = #tpu.dot_dimension_numbers<[1], [0], [0], [1], [0, 0, 1, 1], [], []>} : vector<32x64xf32>, vector<64x128xf32>, vector<32x128xf32> -> vector<32x128xf32>
    %24 = arith.addf %18, %23 : vector<32x128xf32>
    %25 = vector.shape_cast %24 : vector<32x128xf32> to vector<2x16x128xf32>
    %c0_12 = arith.constant 0 : index
    %c0_13 = arith.constant 0 : index
    %c0_14 = arith.constant 0 : index
    %26 = vector.load %arg4[%c0_12, %c0_13, %c0_14] : memref<2x16x128xf32, #tpu.memory_space<vmem>>, vector<2x16x128xf32>
    tpu.vector_store %arg4[%c0_12, %c0_13, %c0_14], %25 {strides = array<i32>} : memref<2x16x128xf32, #tpu.memory_space<vmem>>, vector<2x16x128xf32>,
    return
  }
  func.func @transform_0(%arg0: i32) -> (i32, i32, i32) {
    %c0_i32 = arith.constant 0 : i32
    %c0_i32_0 = arith.constant 0 : i32
    %c0_i32_1 = arith.constant 0 : i32
    %c0_i32_2 = arith.constant 0 : i32
    return %c0_i32, %c0_i32_0, %c0_i32_1 : i32, i32, i32
  }
  func.func @transform_1(%arg0: i32) -> (i32, i32, i32) {
    %c0_i32 = arith.constant 0 : i32
    %c0_i32_0 = arith.constant 0 : i32
    %c0_i32_1 = arith.constant 0 : i32
    %c0_i32_2 = arith.constant 0 : i32
    return %c0_i32, %c0_i32_0, %c0_i32_1 : i32, i32, i32
  }
  func.func @transform_2(%arg0: i32) -> (i32, i32) {
    %c0_i32 = arith.constant 0 : i32
    %c0_i32_0 = arith.constant 0 : i32
    %c0_i32_1 = arith.constant 0 : i32
    return %c0_i32, %c0_i32_0 : i32, i32
  }
  func.func @transform_3(%arg0: i32) -> (i32, i32, i32) {
    %c0_i32 = arith.constant 0 : i32
    %c0_i32_0 = arith.constant 0 : i32
    %c0_i32_1 = arith.constant 0 : i32
    return %c0_i32, %arg0, %c0_i32_0 : i32, i32, i32
  }
}

</mosaic_0001>

<llo_original>
// kernel: prob_conv_forward.1
$region0: #{prob_conv_forward.1}
  #allocation0 [shape = 'u32[]', space=smem, size = 0x4, offset = 0x4, fixed_abs, tag = 'smem constant byte address 0x4 - core index']
  #allocation1 [shape = 'u32[144,128]{1,0:T(1,128)}', space=vmem, size = 0x12000, scoped, tag = 'internal scratch']
  %s0 = inlined_call_operand.vmem [shape: f32[2,18,64], index: 0, kind: input, shape index: {}]
  %s1 = inlined_call_operand.vmem [shape: f32[3,64,128], index: 1, kind: input, shape index: {}]
  %s2 = inlined_call_operand.vmem [shape: f32[1,128], index: 2, kind: input, shape index: {}]
  %s3 = inlined_call_operand.vmem [shape: f32[2,16,128], index: 3, kind: output, shape index: {}]
  %s4 = sld [smem:[#allocation0]]
  $region22: #{prob_conv_forward.1} parent=0
    _
  %s6 = ssub.s32 1, %s4
  %s7 = scalar_select 0, %s6, %s4
  // Predicated region
  $region2: #{prob_conv_forward.1} parent=0 // pred_check
    _
  $region3: #{prob_conv_forward.1} parent=0 // pred_check_branch
    %9 = sbr.rel (0) target = $region5
  $region4: #{prob_conv_forward.1} parent=0 // pred_region
    _
  $region5: #{prob_conv_forward.1} parent=0 // pred_fallthru
    _
  // Predicated region
  $region6: #{prob_conv_forward.1} parent=0 // pred_check
    _
  $region7: #{prob_conv_forward.1} parent=0 // pred_check_branch
    %11 = sbr.rel (0) target = $region9
  $region8: #{prob_conv_forward.1} parent=0 // pred_region
    _
  $region9: #{prob_conv_forward.1} parent=0 // pred_fallthru
    _
  // Predicated region
  $region10: #{prob_conv_forward.1} parent=0 // pred_check
    _
  $region11: #{prob_conv_forward.1} parent=0 // pred_check_branch
    %13 = sbr.rel (0) target = $region13
  $region12: #{prob_conv_forward.1} parent=0 // pred_region
    _
  $region13: #{prob_conv_forward.1} parent=0 // pred_fallthru
    _
  %s14 = smul.u32 0, 16
  %s15 = scalar_lea.vmem %s0, %s14
  %v16 = vld [vmem:[%s15] sm:$0xff]
  %v17 = vld [vmem:[%s15 + $0x8] sm:$0xff]
  %v18 = vld [vmem:[%s15 + $0x10] sm:$0x3]
  %v19 = vld [vmem:[%s15 + $0x18] sm:$0xff]
  %v20 = vld [vmem:[%s15 + $0x20] sm:$0xff]
  %v21 = vld [vmem:[%s15 + $0x28] sm:$0x3]
  %v22 = vld [vmem:[%s2] sm:$0x1]
  %v24 = vlaneseq
  %v25 = vshrl.u32 %v24, 7
  %v26 = vsub.s32 0, %v25
  %v27 = vrot.slane %v22, %v26
  %v29 = vld [vmem:[%s1] sm:$0xff]
  %v30 = vld [vmem:[%s1 + $0x8] sm:$0xff]
  %v31 = vld [vmem:[%s1 + $0x10] sm:$0xff]
  %v32 = vld [vmem:[%s1 + $0x18] sm:$0xff]
  %v33 = vld [vmem:[%s1 + $0x20] sm:$0xff]
  %v34 = vld [vmem:[%s1 + $0x28] sm:$0xff]
  %v35 = vld [vmem:[%s1 + $0x30] sm:$0xff]
  %v36 = vld [vmem:[%s1 + $0x38] sm:$0xff]
  %vm37 = vcmask 523264
  %v39 = vsel %vm37, %v16, 0
  %v42 = vsel %vm37, %v17, 0
  %v45 = vsel %vm37, %v19, 0
  %v48 = vsel %vm37, %v20, 0
  %50 = vmatprep.subr.mxu0 0.0
  %51 = vmatpush1.msra.mxu0 %v29
  %52 = vmatprep.subr.mxu0 0.0
  %53 = vmatpush1.msra.mxu0 %v30
  %54 = vmatprep.subr.mxu0 0.0
  %55 = vmatpush1.msra.mxu0 %v31
  %56 = vmatprep.subr.mxu0 0.0
  %57 = vmatpush1.msra.mxu0 %v32
  %58 = vmatprep.subr.mxu0 0.0
  %59 = vmatpush1.msra.mxu0 %v33
  %60 = vmatprep.subr.mxu0 0.0
  %61 = vmatpush1.msra.mxu0 %v34
  %62 = vmatprep.subr.mxu0 0.0
  %63 = vmatpush1.msra.mxu0 %v35
  %64 = vmatprep.subr.mxu0 0.0
  %65 = vmatpush1.msra.mxu0 %v36
  %66 = vmatprep.subr.mxu0 0.0
  %67 = vmatpush1.msra.mxu0 0.0
  %68 = vmatprep.subr.mxu0 0.0
  %69 = vmatpush1.msra.mxu0 0.0
  %70 = vmatprep.subr.mxu0 0.0
  %71 = vmatpush1.msra.mxu0 0.0
  %72 = vmatprep.subr.mxu0 0.0
  %73 = vmatpush1.msra.mxu0 0.0
  %74 = vmatprep.subr.mxu0 0.0
  %75 = vmatpush1.msra.mxu0 0.0
  %76 = vmatprep.subr.mxu0 0.0
  %77 = vmatpush1.msra.mxu0 0.0
  %78 = vmatprep.subr.mxu0 0.0
  %79 = vmatpush1.msra.mxu0 0.0
  %80 = vmatprep.subr.mxu0 0.0
  %81 = vmatpush1.msra.mxu0 0.0
  %82 = vmatprep.subr.mxu0 0.0
  %83 = vmatpush1.msra.mxu0 0.0
  %84 = vmatprep.subr.mxu0 0.0
  %85 = vmatpush1.msra.mxu0 0.0
  %86 = vmatprep.subr.mxu0 0.0
  %87 = vmatpush1.msra.mxu0 0.0
  %88 = vmatprep.subr.mxu0 0.0
  %89 = vmatpush1.msra.mxu0 0.0
  %90 = vmatprep.subr.mxu0 0.0
  %91 = vmatpush1.msra.mxu0 0.0
  %92 = vmatprep.subr.mxu0 0.0
  %93 = vmatpush1.msra.mxu0 0.0
  %94 = vmatprep.subr.mxu0 0.0
  %95 = vmatpush1.msra.mxu0 0.0
  %96 = vmatprep.subr.mxu0 0.0
  %97 = vmatpush1.msra.mxu0 0.0
  %98 = vmatprep.subr.mxu0 0.0
  %99 = vmatpush1.msra.mxu0 0.0
  %100 = vmatprep.subr.mxu0 0.0
  %101 = vmatpush1.msra.mxu0 0.0
  %102 = vmatprep.subr.mxu0 0.0
  %103 = vmatpush1.msra.mxu0 0.0
  %104 = vmatprep.subr.mxu0 0.0
  %105 = vmatpush1.msra.mxu0 0.0
  %106 = vmatprep.subr.mxu0 0.0
  %107 = vmatpush1.msra.mxu0 0.0
  %108 = vmatprep.subr.mxu0 0.0
  %109 = vmatpush1.msra.mxu0 0.0
  %110 = vmatprep.subr.mxu0 0.0
  %111 = vmatpush1.msra.mxu0 0.0
  %112 = vmatprep.subr.mxu0 0.0
  %113 = vmatpush1.msra.mxu0 0.0
  %114 = vmatprep.mubr.f32.mxu0 0.0
  %115 = vmatmul.mubr.f32.gmra.mrb[0].mxu0 %v39
  %v116 = vpop.f32.mrb[0].mxu0
  %v117 = vadd.f32 0.0, %v116
  %v118 = vpop.f32.mrb[0].mxu0
  %119 = vmatprep.mubr.f32.mxu0 0.0
  %120 = vmatmul.mubr.f32.gmra.mrb[0].mxu0 %v42
  %v121 = vpop.f32.mrb[0].mxu0
  %v122 = vadd.f32 0.0, %v121
  %v123 = vpop.f32.mrb[0].mxu0
  %124 = vmatprep.mubr.f32.mxu0 0.0
  %125 = vmatmul.mubr.f32.gmra.mrb[0].mxu0 %v45
  %v126 = vpop.f32.mrb[0].mxu0
  %v127 = vadd.f32 0.0, %v126
  %v128 = vpop.f32.mrb[0].mxu0
  %129 = vmatprep.mubr.f32.mxu0 0.0
  %130 = vmatmul.mubr.f32.gmra.mrb[0].mxu0 %v48
  %v131 = vpop.f32.mrb[0].mxu0
  %v132 = vadd.f32 0.0, %v131
  %v133 = vpop.f32.mrb[0].mxu0
  %134 = vdwg.mxu0
  %v135 = vadd.f32 %v27, %v117
  %v136 = vadd.f32 %v27, %v122
  %v137 = vadd.f32 %v27, %v127
  %v138 = vadd.f32 %v27, %v132
  %vm141 = vcmask 1046528
  %v142 = vrot.slane %v16, 1
  %v143 = vrot.slane %v17, 1
  %v144 = vsel %vm141, %v142, %v143
  %v145 = vrot.slane %v18, 1
  %v146 = vsel %vm141, %v143, %v145
  %v147 = vrot.slane %v19, 1
  %v148 = vrot.slane %v20, 1
  %v149 = vsel %vm141, %v147, %v148
  %v150 = vrot.slane %v21, 1
  %v151 = vsel %vm141, %v148, %v150
  %s152 = scalar_lea.vmem %s1, 64
  %v153 = vld [vmem:[%s152] sm:$0xff]
  %v154 = vld [vmem:[%s152 + $0x8] sm:$0xff]
  %v155 = vld [vmem:[%s152 + $0x10] sm:$0xff]
  %v156 = vld [vmem:[%s152 + $0x18] sm:$0xff]
  %v157 = vld [vmem:[%s152 + $0x20] sm:$0xff]
  %v158 = vld [vmem:[%s152 + $0x28] sm:$0xff]
  %v159 = vld [vmem:[%s152 + $0x30] sm:$0xff]
  %v160 = vld [vmem:[%s152 + $0x38] sm:$0xff]
  %v161 = vsel %vm37, %v144, 0
  %v163 = vsel %vm37, %v146, 0
  %v165 = vsel %vm37, %v149, 0
  %v167 = vsel %vm37, %v151, 0
  %169 = vmatprep.subr.mxu0 0.0
  %170 = vmatpush1.msra.mxu0 %v153
  %171 = vmatprep.subr.mxu0 0.0
  %172 = vmatpush1.msra.mxu0 %v154
  %173 = vmatprep.subr.mxu0 0.0
  %174 = vmatpush1.msra.mxu0 %v155
  %175 = vmatprep.subr.mxu0 0.0
  %176 = vmatpush1.msra.mxu0 %v156
  %177 = vmatprep.subr.mxu0 0.0
  %178 = vmatpush1.msra.mxu0 %v157
  %179 = vmatprep.subr.mxu0 0.0
  %180 = vmatpush1.msra.mxu0 %v158
  %181 = vmatprep.subr.mxu0 0.0
  %182 = vmatpush1.msra.mxu0 %v159
  %183 = vmatprep.subr.mxu0 0.0
  %184 = vmatpush1.msra.mxu0 %v160
  %185 = vmatprep.subr.mxu0 0.0
  %186 = vmatpush1.msra.mxu0 0.0
  %187 = vmatprep.subr.mxu0 0.0
  %188 = vmatpush1.msra.mxu0 0.0
  %189 = vmatprep.subr.mxu0 0.0
  %190 = vmatpush1.msra.mxu0 0.0
  %191 = vmatprep.subr.mxu0 0.0
  %192 = vmatpush1.msra.mxu0 0.0
  %193 = vmatprep.subr.mxu0 0.0
  %194 = vmatpush1.msra.mxu0 0.0
  %195 = vmatprep.subr.mxu0 0.0
  %196 = vmatpush1.msra.mxu0 0.0
  %197 = vmatprep.subr.mxu0 0.0
  %198 = vmatpush1.msra.mxu0 0.0
  %199 = vmatprep.subr.mxu0 0.0
  %200 = vmatpush1.msra.mxu0 0.0
  %201 = vmatprep.subr.mxu0 0.0
  %202 = vmatpush1.msra.mxu0 0.0
  %203 = vmatprep.subr.mxu0 0.0
  %204 = vmatpush1.msra.mxu0 0.0
  %205 = vmatprep.subr.mxu0 0.0
  %206 = vmatpush1.msra.mxu0 0.0
  %207 = vmatprep.subr.mxu0 0.0
  %208 = vmatpush1.msra.mxu0 0.0
  %209 = vmatprep.subr.mxu0 0.0
  %210 = vmatpush1.msra.mxu0 0.0
  %211 = vmatprep.subr.mxu0 0.0
  %212 = vmatpush1.msra.mxu0 0.0
  %213 = vmatprep.subr.mxu0 0.0
  %214 = vmatpush1.msra.mxu0 0.0
  %215 = vmatprep.subr.mxu0 0.0
  %216 = vmatpush1.msra.mxu0 0.0
  %217 = vmatprep.subr.mxu0 0.0
  %218 = vmatpush1.msra.mxu0 0.0
  %219 = vmatprep.subr.mxu0 0.0
  %220 = vmatpush1.msra.mxu0 0.0
  %221 = vmatprep.subr.mxu0 0.0
  %222 = vmatpush1.msra.mxu0 0.0
  %223 = vmatprep.subr.mxu0 0.0
  %224 = vmatpush1.msra.mxu0 0.0
  %225 = vmatprep.subr.mxu0 0.0
  %226 = vmatpush1.msra.mxu0 0.0
  %227 = vmatprep.subr.mxu0 0.0
  %228 = vmatpush1.msra.mxu0 0.0
  %229 = vmatprep.subr.mxu0 0.0
  %230 = vmatpush1.msra.mxu0 0.0
  %231 = vmatprep.subr.mxu0 0.0
  %232 = vmatpush1.msra.mxu0 0.0
  %233 = vmatprep.mubr.f32.mxu0 0.0
  %234 = vmatmul.mubr.f32.gmra.mrb[0].mxu0 %v161
  %v235 = vpop.f32.mrb[0].mxu0
  %v236 = vadd.f32 0.0, %v235
  %v237 = vpop.f32.mrb[0].mxu0
  %238 = vmatprep.mubr.f32.mxu0 0.0
  %239 = vmatmul.mubr.f32.gmra.mrb[0].mxu0 %v163
  %v240 = vpop.f32.mrb[0].mxu0
  %v241 = vadd.f32 0.0, %v240
  %v242 = vpop.f32.mrb[0].mxu0
  %243 = vmatprep.mubr.f32.mxu0 0.0
  %244 = vmatmul.mubr.f32.gmra.mrb[0].mxu0 %v165
  %v245 = vpop.f32.mrb[0].mxu0
  %v246 = vadd.f32 0.0, %v245
  %v247 = vpop.f32.mrb[0].mxu0
  %248 = vmatprep.mubr.f32.mxu0 0.0
  %249 = vmatmul.mubr.f32.gmra.mrb[0].mxu0 %v167
  %v250 = vpop.f32.mrb[0].mxu0
  %v251 = vadd.f32 0.0, %v250
  %v252 = vpop.f32.mrb[0].mxu0
  %253 = vdwg.mxu0
  %v254 = vadd.f32 %v135, %v236
  %v255 = vadd.f32 %v136, %v241
  %v256 = vadd.f32 %v137, %v246
  %v257 = vadd.f32 %v138, %v251
  %vm258 = vcmask 1045504
  %v259 = vrot.slane %v16, 2
  %v260 = vrot.slane %v17, 2
  %v261 = vsel %vm258, %v259, %v260
  %v262 = vrot.slane %v18, 2
  %v263 = vsel %vm258, %v260, %v262
  %v264 = vrot.slane %v19, 2
  %v265 = vrot.slane %v20, 2
  %v266 = vsel %vm258, %v264, %v265
  %v267 = vrot.slane %v21, 2
  %v268 = vsel %vm258, %v265, %v267
  %s269 = scalar_lea.vmem %s1, 128
  %v270 = vld [vmem:[%s269] sm:$0xff]
  %v271 = vld [vmem:[%s269 + $0x8] sm:$0xff]
  %v272 = vld [vmem:[%s269 + $0x10] sm:$0xff]
  %v273 = vld [vmem:[%s269 + $0x18] sm:$0xff]
  %v274 = vld [vmem:[%s269 + $0x20] sm:$0xff]
  %v275 = vld [vmem:[%s269 + $0x28] sm:$0xff]
  %v276 = vld [vmem:[%s269 + $0x30] sm:$0xff]
  %v277 = vld [vmem:[%s269 + $0x38] sm:$0xff]
  %v278 = vsel %vm37, %v261, 0
  %v280 = vsel %vm37, %v263, 0
  %v282 = vsel %vm37, %v266, 0
  %v284 = vsel %vm37, %v268, 0
  %286 = vmatprep.subr.mxu0 0.0
  %287 = vmatpush1.msra.mxu0 %v270
  %288 = vmatprep.subr.mxu0 0.0
  %289 = vmatpush1.msra.mxu0 %v271
  %290 = vmatprep.subr.mxu0 0.0
  %291 = vmatpush1.msra.mxu0 %v272
  %292 = vmatprep.subr.mxu0 0.0
  %293 = vmatpush1.msra.mxu0 %v273
  %294 = vmatprep.subr.mxu0 0.0
  %295 = vmatpush1.msra.mxu0 %v274
  %296 = vmatprep.subr.mxu0 0.0
  %297 = vmatpush1.msra.mxu0 %v275
  %298 = vmatprep.subr.mxu0 0.0
  %299 = vmatpush1.msra.mxu0 %v276
  %300 = vmatprep.subr.mxu0 0.0
  %301 = vmatpush1.msra.mxu0 %v277
  %302 = vmatprep.subr.mxu0 0.0
  %303 = vmatpush1.msra.mxu0 0.0
  %304 = vmatprep.subr.mxu0 0.0
  %305 = vmatpush1.msra.mxu0 0.0
  %306 = vmatprep.subr.mxu0 0.0
  %307 = vmatpush1.msra.mxu0 0.0
  %308 = vmatprep.subr.mxu0 0.0
  %309 = vmatpush1.msra.mxu0 0.0
  %310 = vmatprep.subr.mxu0 0.0
  %311 = vmatpush1.msra.mxu0 0.0
  %312 = vmatprep.subr.mxu0 0.0
  %313 = vmatpush1.msra.mxu0 0.0
  %314 = vmatprep.subr.mxu0 0.0
  %315 = vmatpush1.msra.mxu0 0.0
  %316 = vmatprep.subr.mxu0 0.0
  %317 = vmatpush1.msra.mxu0 0.0
  %318 = vmatprep.subr.mxu0 0.0
  %319 = vmatpush1.msra.mxu0 0.0
  %320 = vmatprep.subr.mxu0 0.0
  %321 = vmatpush1.msra.mxu0 0.0
  %322 = vmatprep.subr.mxu0 0.0
  %323 = vmatpush1.msra.mxu0 0.0
  %324 = vmatprep.subr.mxu0 0.0
  %325 = vmatpush1.msra.mxu0 0.0
  %326 = vmatprep.subr.mxu0 0.0
  %327 = vmatpush1.msra.mxu0 0.0
  %328 = vmatprep.subr.mxu0 0.0
  %329 = vmatpush1.msra.mxu0 0.0
  %330 = vmatprep.subr.mxu0 0.0
  %331 = vmatpush1.msra.mxu0 0.0
  %332 = vmatprep.subr.mxu0 0.0
  %333 = vmatpush1.msra.mxu0 0.0
  %334 = vmatprep.subr.mxu0 0.0
  %335 = vmatpush1.msra.mxu0 0.0
  %336 = vmatprep.subr.mxu0 0.0
  %337 = vmatpush1.msra.mxu0 0.0
  %338 = vmatprep.subr.mxu0 0.0
  %339 = vmatpush1.msra.mxu0 0.0
  %340 = vmatprep.subr.mxu0 0.0
  %341 = vmatpush1.msra.mxu0 0.0
  %342 = vmatprep.subr.mxu0 0.0
  %343 = vmatpush1.msra.mxu0 0.0
  %344 = vmatprep.subr.mxu0 0.0
  %345 = vmatpush1.msra.mxu0 0.0
  %346 = vmatprep.subr.mxu0 0.0
  %347 = vmatpush1.msra.mxu0 0.0
  %348 = vmatprep.subr.mxu0 0.0
  %349 = vmatpush1.msra.mxu0 0.0
  %350 = vmatprep.mubr.f32.mxu0 0.0
  %351 = vmatmul.mubr.f32.gmra.mrb[0].mxu0 %v278
  %v352 = vpop.f32.mrb[0].mxu0
  %v353 = vadd.f32 0.0, %v352
  %v354 = vpop.f32.mrb[0].mxu0
  %355 = vmatprep.mubr.f32.mxu0 0.0
  %356 = vmatmul.mubr.f32.gmra.mrb[0].mxu0 %v280
  %v357 = vpop.f32.mrb[0].mxu0
  %v358 = vadd.f32 0.0, %v357
  %v359 = vpop.f32.mrb[0].mxu0
  %360 = vmatprep.mubr.f32.mxu0 0.0
  %361 = vmatmul.mubr.f32.gmra.mrb[0].mxu0 %v282
  %v362 = vpop.f32.mrb[0].mxu0
  %v363 = vadd.f32 0.0, %v362
  %v364 = vpop.f32.mrb[0].mxu0
  %365 = vmatprep.mubr.f32.mxu0 0.0
  %366 = vmatmul.mubr.f32.gmra.mrb[0].mxu0 %v284
  %v367 = vpop.f32.mrb[0].mxu0
  %v368 = vadd.f32 0.0, %v367
  %v369 = vpop.f32.mrb[0].mxu0
  %370 = vdwg.mxu0
  %v371 = vadd.f32 %v254, %v353
  %v372 = vadd.f32 %v255, %v358
  %v373 = vadd.f32 %v256, %v363
  %v374 = vadd.f32 %v257, %v368
  %375 = vst [vmem:[%s3] sm:$0xff] %v371
  %376 = vst [vmem:[%s3 + $0x8] sm:$0xff] %v372
  %377 = vst [vmem:[%s3 + $0x10] sm:$0xff] %v373
  %378 = vst [vmem:[%s3 + $0x18] sm:$0xff] %v374
  // Predicated region
  $region14: #{prob_conv_forward.1} parent=0 // pred_check
    _
  $region15: #{prob_conv_forward.1} parent=0 // pred_check_branch
    %380 = sbr.rel (0) target = $region17
  $region16: #{prob_conv_forward.1} parent=0 // pred_region
    _
  $region17: #{prob_conv_forward.1} parent=0 // pred_fallthru
    _
  // Predicated region
  $region18: #{prob_conv_forward.1} parent=0 // pred_check
    _
  $region19: #{prob_conv_forward.1} parent=0 // pred_check_branch
    %382 = sbr.rel (0) target = $region21
  $region20: #{prob_conv_forward.1} parent=0 // pred_region
    _
  $region21: #{prob_conv_forward.1} parent=0 // pred_fallthru
    _

</llo_original>
